<compile_context>
chip_gen: v7x
topology: tpu7x:2x2x1
jax: 0.10.0
libtpu: 0.0.40
codegen_flags: <defaults>
</compile_context>

<pallas_src>
import functools

import numpy as np
import jax
import jax.numpy as jnp
from jax.experimental import pallas as pl
from jax.experimental.pallas import tpu as pltpu


MAX_TL = 1024                      # output lanes per time tile (multiple of 128)
COMPUTE_DTYPE = jnp.bfloat16       # activations / weights dtype fed to the MXU
VMEM_LIMIT = 48 * 1024 * 1024      # explicit scoped-VMEM budget (safe on v5e/v6e/v7x)


def get_padding(k, d):
    return d * (k - 1) // 2


# ------------------------------ Pallas kernel ---------------------------------

def _conv1d_kernel(*refs, K, dil, TL, halo, cin, split_halo, has_res, use_deep,
                   pre_leaky, post_tanh, out_scale):
    i = 0
    x_ref = refs[i]; i += 1
    h_ref = None
    if split_halo:
        h_ref = refs[i]; i += 1
    w_ref = refs[i]; b_ref = refs[i + 1]; i += 2
    res_ref = None
    if has_res:
        res_ref = refs[i]; i += 1
    o_ref = refs[i]

    x = x_ref[...]                                    # (Cin, TL[+halo])
    if split_halo and halo > 0:
        x = jnp.concatenate([x, h_ref[...]], axis=1)  # append halo columns
    if pre_leaky is not None:                         # fused LeakyReLU on the input
        x = jnp.where(x >= 0, x, pre_leaky * x)

    w = w_ref[...]                                    # (Cout, K*Cin)
    if use_deep:
        # one deep-contraction MXU matmul: stack the K shifted views along sublanes
        xs = jnp.concatenate([x[:, k * dil:k * dil + TL] for k in range(K)], axis=0)
        acc = jnp.dot(w, xs, preferred_element_type=jnp.float32)
    else:
        acc = jnp.dot(w[:, :cin], x[:, :TL], preferred_element_type=jnp.float32)
        for k in range(1, K):
            acc = acc + jnp.dot(w[:, k * cin:(k + 1) * cin],
                                x[:, k * dil:k * dil + TL],
                                preferred_element_type=jnp.float32)

    acc = acc + b_ref[...]                            # bias (Cout, 1) broadcast
    if out_scale != 1.0:
        acc = acc * out_scale
    if has_res:
        acc = acc + res_ref[...].astype(jnp.float32)  # fused residual / MRF accumulation
    if post_tanh:
        acc = jnp.tanh(acc)
    o_ref[...] = acc.astype(o_ref.dtype)


def pallas_conv1d(x, w_flat, b, *, K, dilation=1, pad_l=0, pad_r=0,
                  pre_leaky=None, post_tanh=False, res=None, out_scale=1.0,
                  compute_dtype=COMPUTE_DTYPE, out_dtype=None, max_tl=MAX_TL):
    """Dilated conv1d.  x: (B, Cin, L); w_flat: (Cout, K*Cin) with
    w_flat[o, k*Cin + i] = W[o, i, k]; b: (Cout,).  Optionally fuses LeakyReLU on the
    input, an output scale, a residual add and tanh.  Returns (B, Cout, L_out)."""
    B, Cin, L = x.shape
    Cout = w_flat.shape[0]
    assert w_flat.shape[1] == K * Cin
    halo = dilation * (K - 1)
    L_out = L + pad_l + pad_r - halo
    assert L_out > 0
    out_dtype = out_dtype if out_dtype is not None else compute_dtype

    if L_out <= max_tl:
        TL, n_tl = L_out, 1
    else:
        TL = max_tl                       # multiple of 128 -> lane-dense output tiles
        n_tl = -(-L_out // TL)
    L_main = n_tl * TL
    halo_w = max(halo, 1)
    total_in = L_main + halo_w
    split_halo = n_tl > 1

    x = x.astype(compute_dtype)
    x_pad = jnp.pad(x, ((0, 0), (0, 0), (pad_l, total_in - pad_l - L)))
    w_c = w_flat.astype(compute_dtype)
    b_c = b.reshape(Cout, 1).astype(jnp.float32)

    itemsize = jnp.dtype(compute_dtype).itemsize
    row_align = 8 * (4 // itemsize)       # 8 rows f32, 16 rows bf16 (sublane packing)
    use_deep = (K > 1) and (Cin % row_align == 0)

    if split_halo:
        x_main = x_pad[:, :, :L_main]
        starts = (jnp.arange(n_tl) + 1) * TL
        idx = starts[:, None] + jnp.arange(halo_w)[None, :]
        x_halo = jnp.transpose(x_pad[:, :, idx], (0, 2, 1, 3))   # (B, n_tl, Cin, halo_w)
        inputs = [x_main, x_halo, w_c, b_c]
        in_specs = [
            pl.BlockSpec((pl.Squeezed(), Cin, TL), lambda bb, tt: (bb, 0, tt)),
            pl.BlockSpec((pl.Squeezed(), pl.Squeezed(), Cin, halo_w),
                         lambda bb, tt: (bb, tt, 0, 0)),
            pl.BlockSpec((Cout, K * Cin), lambda bb, tt: (0, 0)),
            pl.BlockSpec((Cout, 1), lambda bb, tt: (0, 0)),
        ]
    else:
        inputs = [x_pad, w_c, b_c]
        in_specs = [
            pl.BlockSpec((pl.Squeezed(), Cin, total_in), lambda bb, tt: (bb, 0, 0)),
            pl.BlockSpec((Cout, K * Cin), lambda bb, tt: (0, 0)),
            pl.BlockSpec((Cout, 1), lambda bb, tt: (0, 0)),
        ]

    has_res = res is not None
    if has_res:
        r = res.astype(compute_dtype)
        if r.shape[-1] != L_main:
            r = jnp.pad(r, ((0, 0), (0, 0), (0, L_main - r.shape[-1])))
        inputs.append(r)
        in_specs.append(pl.BlockSpec((pl.Squeezed(), Cout, TL),
                                     lambda bb, tt: (bb, 0, tt)))

    kernel = functools.partial(
        _conv1d_kernel, K=K, dil=dilation, TL=TL, halo=halo, cin=Cin,
        split_halo=split_halo, has_res=has_res, use_deep=use_deep,
        pre_leaky=pre_leaky, post_tanh=post_tanh, out_scale=float(out_scale))

    out = pl.pallas_call(
        kernel,
        out_shape=jax.ShapeDtypeStruct((B, Cout, L_main), out_dtype),
        grid=(B, n_tl),
        in_specs=in_specs,
        out_specs=pl.BlockSpec((pl.Squeezed(), Cout, TL), lambda bb, tt: (bb, 0, tt)),
        compiler_params=pltpu.CompilerParams(
            dimension_semantics=("parallel", "parallel"),
            vmem_limit_bytes=VMEM_LIMIT),
    )(*inputs)
    if L_main != L_out:
        out = out[:, :, :L_out]
    return out


# ------------------------------ Weight preparation -----------------------------

def flatten_conv_weight(w):
    """(Cout, Cin, K) -> (Cout, K*Cin) matching the kernel's tap-major stacking."""
    Cout, Cin, K = w.shape
    return jnp.transpose(w, (0, 2, 1)).reshape(Cout, K * Cin)


def prepare_conv(w, b, dilation, dtype):
    Cout, Cin, K = w.shape
    return dict(w=flatten_conv_weight(w).astype(dtype), b=jnp.asarray(b, jnp.float32),
                K=K, dil=dilation, pad=get_padding(K, dilation), Cout=Cout)


def prepare_conv_transpose(w, b, stride, padding, dtype):
    """Polyphase decomposition of a PyTorch ConvTranspose1d weight (Cin, Cout, K)."""
    Cin, Cout, K = w.shape
    w_eq = jnp.transpose(w[:, :, ::-1], (1, 0, 2))     # flipped/transposed conv weight
    P = K - 1 - padding
    phases = []
    for r in range(stride):
        taps = [k for k in range(K) if (k + r - P) % stride == 0]
        if taps:
            w_r = jnp.stack([w_eq[:, :, k] for k in taps], axis=-1)   # (Cout, Cin, M)
            delta0 = (taps[0] + r - P) // stride
        else:                                           # phase only gets the bias
            w_r = jnp.zeros((Cout, Cin, 1), w_eq.dtype)
            delta0 = 0
        phases.append(dict(w=flatten_conv_weight(w_r).astype(dtype),
                           M=w_r.shape[-1] if taps else 1, delta0=delta0))
    return dict(phases=phases, b=jnp.asarray(b, jnp.float32), stride=stride,
                K=K, padding=padding, Cout=Cout)


def prepare_params(raw, k_u, k_r, d_r, dtype=COMPUTE_DTYPE):
    """Pre-transpose / flatten / polyphase-decompose all weights once.
    weight_norm is folded as W == v (exact at PyTorch init where g = ||v||).
    TODO(synk): for trained checkpoints fold W = g * v / ||v|| before calling this."""
    params = dict(prep=prepare_conv(raw["prep_w"], raw["prep_b"], 1, dtype),
                  up=[], mrf=[])
    for i in range(len(k_u)):
        uw, ub = raw["up"][i]
        params["up"].append(prepare_conv_transpose(uw, ub, k_u[i] // 2, k_u[i] // 4,
                                                   dtype))
        mrf_i = []
        for r in range(len(k_r)):
            rb = []
            for m in range(len(d_r[r])):
                chain = []
                for l, d in enumerate(d_r[r][m]):
                    w, b = raw["mrf"][i][r][m][l]
                    chain.append(prepare_conv(w, b, d, dtype))
                rb.append(chain)
            mrf_i.append(rb)
        params["mrf"].append(mrf_i)
    # post conv: pad Cout 1 -> 8 for sublane-friendly stores (take row 0 afterwards)
    pw, pb = raw["post_w"], raw["post_b"]
    cout, cin, kk = pw.shape
    pw8 = jnp.zeros((8, cin, kk), pw.dtype).at[:cout].set(pw)
    pb8 = jnp.zeros((8,), jnp.float32).at[:cout].set(jnp.asarray(pb, jnp.float32))
    params["post"] = dict(w=flatten_conv_weight(pw8).astype(dtype), b=pb8,
                          K=kk, dil=1, pad=get_padding(kk, 1), Cout=8)
    return params


# ------------------------------ Model forward ----------------------------------

def apply_conv(x, p, *, pre_leaky=None, post_tanh=False, res=None, out_scale=1.0,
               compute_dtype=COMPUTE_DTYPE, out_dtype=None, max_tl=MAX_TL):
    return pallas_conv1d(x, p["w"], p["b"], K=p["K"], dilation=p["dil"],
                         pad_l=p["pad"], pad_r=p["pad"], pre_leaky=pre_leaky,
                         post_tanh=post_tanh, res=res, out_scale=out_scale,
                         compute_dtype=compute_dtype, out_dtype=out_dtype, max_tl=max_tl)


def apply_conv_transpose(x, p, *, pre_leaky=None, compute_dtype=COMPUTE_DTYPE,
                         max_tl=MAX_TL):
    """Polyphase ConvTranspose1d: `stride` small convs on the original x, interleaved."""
    B, Cin, L = x.shape
    s, K, pad, Cout = p["stride"], p["K"], p["padding"], p["Cout"]
    L_out = (L - 1) * s - 2 * pad + K
    ys, lqs = [], []
    for r, ph in enumerate(p["phases"]):
        Lq = -(-(L_out - r) // s)                      # outputs in phase r
        M, d0 = ph["M"], ph["delta0"]
        shift, pad_l = max(0, d0), max(0, -d0)
        x_use = x[:, :, shift:] if shift else x
        pad_r = max(0, Lq + (M - 1) - pad_l - x_use.shape[-1])
        y = pallas_conv1d(x_use, ph["w"], p["b"], K=M, dilation=1,
                          pad_l=pad_l, pad_r=pad_r, pre_leaky=pre_leaky,
                          compute_dtype=compute_dtype, max_tl=max_tl)
        ys.append(y[:, :, :Lq])
        lqs.append(Lq)
    lq_max = max(lqs)
    ys = [jnp.pad(y, ((0, 0), (0, 0), (0, lq_max - y.shape[-1]))) for y in ys]
    out = jnp.stack(ys, axis=-1).reshape(B, Cout, lq_max * s)    # interleave phases
    return out[:, :, :L_out]


def mrf_fwd(x, mrf_params, leaky, compute_dtype, max_tl):
    """MRF(x) = x + (1/n) * sum over all ResBlock chains of chain(x); the residual
    accumulation and 1/n scaling are fused into the last conv of each chain."""
    inv_n = 1.0 / len(mrf_params)
    acc = x
    for rb in mrf_params:                 # one ResBlock per k_r entry
        for chain in rb:                  # dri sub-blocks
            h = x
            for li, layer in enumerate(chain):
                if li < len(chain) - 1:
                    h = apply_conv(h, layer, pre_leaky=leaky,
                                   compute_dtype=compute_dtype, max_tl=max_tl)
                else:
                    acc = apply_conv(h, layer, pre_leaky=leaky, res=acc,
                                     out_scale=inv_n, compute_dtype=compute_dtype,
                                     max_tl=max_tl)
    return acc


def generator_fwd(x, params, leaky=0.1, compute_dtype=COMPUTE_DTYPE, max_tl=MAX_TL):
    out = apply_conv(x, params["prep"], compute_dtype=compute_dtype, max_tl=max_tl)
    for up_p, mrf_p in zip(params["up"], params["mrf"]):
        out = apply_conv_transpose(out, up_p, pre_leaky=leaky,
                                   compute_dtype=compute_dtype, max_tl=max_tl)
        out = mrf_fwd(out, mrf_p, leaky, compute_dtype, max_tl)
    # final LeakyReLU + post_conv + tanh fused into one kernel; Cout padded to 8
    out = apply_conv(out, params["post"], pre_leaky=leaky, post_tanh=True,
                     out_dtype=jnp.float32, compute_dtype=compute_dtype, max_tl=max_tl)
    return out[:, 0, :]                   # squeeze(1)


# ------------------------------ Raw param init ----------------------------------

def init_raw_params(key, n_mels, hid, k_u, k_r, d_r):
    counter = [0]

    def nxt():
        counter[0] += 1
        return jax.random.fold_in(key, counter[0])

    def w_init(shape):
        return 0.05 * jax.random.normal(nxt(), shape, jnp.float32)

    raw = {"prep_w": w_init((hid, n_mels, 7)), "prep_b": w_init((hid,)),
           "up": [], "mrf": []}
    cur = hid
    for i in range(len(k_u)):
        raw["up"].append((w_init((cur, cur // 2, k_u[i])), w_init((cur // 2,))))
        cur //= 2
        mrf_i = []
        for r in range(len(k_r)):
            rb = []
            for m in range(len(d_r[r])):
                rb.append([(w_init((cur, cur, k_r[r])), w_init((cur,)))
                           for _ in d_r[r][m]])
            mrf_i.append(rb)
        raw["mrf"].append(mrf_i)
    raw["post_w"] = w_init((1, cur, 7))
    raw["post_b"] = w_init((1,))
    return raw


# ------------------------------ NumPy reference ---------------------------------

def _np(x):
    return np.asarray(x, np.float64)


def np_leaky(x, s):
    return np.where(x >= 0, x, s * x)


def np_conv1d(x, w, b, dil, pad):
    B, Cin, L = x.shape
    Cout, _, K = w.shape
    xp = np.pad(x, ((0, 0), (0, 0), (pad, pad)))
    Lo = L + 2 * pad - dil * (K - 1)
    out = np.zeros((B, Cout, Lo))
    for k in range(K):
        out += np.einsum('oi,bil->bol', w[:, :, k], xp[:, :, k * dil:k * dil + Lo])
    return out + b[None, :, None]


def np_conv_transpose1d(x, w, b, stride, pad):
    B, Cin, L = x.shape
    _, Cout, K = w.shape
    x_up = np.zeros((B, Cin, (L - 1) * stride + 1))
    x_up[:, :, ::stride] = x
    w_eq = np.transpose(w[:, :, ::-1], (1, 0, 2))
    return np_conv1d(x_up, w_eq, b, 1, K - 1 - pad)


def np_generator(x, raw, k_u, k_r, d_r, leaky):
    out = np_conv1d(_np(x), _np(raw["prep_w"]), _np(raw["prep_b"]), 1, 3)
    for i in range(len(k_u)):
        uw, ub = raw["up"][i]
        out = np_conv_transpose1d(np_leaky(out, leaky), _np(uw), _np(ub),
                                  k_u[i] // 2, k_u[i] // 4)
        mrf_out = np.zeros_like(out)
        for r in range(len(k_r)):
            rb_out = np.zeros_like(out)
            for m in range(len(d_r[r])):
                h = out
                for l, d in enumerate(d_r[r][m]):
                    w, b = raw["mrf"][i][r][m][l]
                    h = np_conv1d(np_leaky(h, leaky), _np(w), _np(b), d,
                                  get_padding(k_r[r], d))
                rb_out += h
            rb_out += out
            mrf_out += rb_out
        out = mrf_out / len(k_r)
    out = np_leaky(out, leaky)
    out = np_conv1d(out, _np(raw["post_w"]), _np(raw["post_b"]), 1, 3)[:, 0, :]
    return np.tanh(out)


# ------------------------------ Main --------------------------------------------

if __name__ == "__main__":
    key = jax.random.PRNGKey(0)

    # ---- unit check 1: single-tile conv, deep-contraction path (f32) ----
    k = jax.random.fold_in(key, 1)
    x = jax.random.normal(jax.random.fold_in(k, 0), (1, 16, 96), jnp.float32)
    w = 0.1 * jax.random.normal(jax.random.fold_in(k, 1), (16, 16, 5), jnp.float32)
    b = 0.1 * jax.random.normal(jax.random.fold_in(k, 2), (16,), jnp.float32)
    pad = get_padding(5, 2)
    y = pallas_conv1d(x, flatten_conv_weight(w), b, K=5, dilation=2, pad_l=pad,
                      pad_r=pad, pre_leaky=0.1, compute_dtype=jnp.float32,
                      out_dtype=jnp.float32)
    ref = np_conv1d(np_leaky(_np(x), 0.1), _np(w), _np(b), 2, pad)
    assert np.allclose(_np(jax.block_until_ready(y)), ref, rtol=2e-2, atol=1e-2)

    # ---- unit check 2: time-tiled conv with halo + fused residual/scale (f32) ----
    k = jax.random.fold_in(key, 2)
    x = jax.random.normal(jax.random.fold_in(k, 0), (2, 16, 320), jnp.float32)
    w = 0.1 * jax.random.normal(jax.random.fold_in(k, 1), (8, 16, 3), jnp.float32)
    b = 0.1 * jax.random.normal(jax.random.fold_in(k, 2), (8,), jnp.float32)
    r_in = jax.random.normal(jax.random.fold_in(k, 3), (2, 8, 320), jnp.float32)
    pad = get_padding(3, 3)
    y = pallas_conv1d(x, flatten_conv_weight(w), b, K=3, dilation=3, pad_l=pad,
                      pad_r=pad, pre_leaky=0.1, res=r_in, out_scale=0.5,
                      compute_dtype=jnp.float32, out_dtype=jnp.float32, max_tl=128)
    ref = 0.5 * np_conv1d(np_leaky(_np(x), 0.1), _np(w), _np(b), 3, pad) + _np(r_in)
    assert np.allclose(_np(jax.block_until_ready(y)), ref, rtol=2e-2, atol=1e-2)

    # ---- unit check 3: polyphase ConvTranspose1d (f32) ----
    k = jax.random.fold_in(key, 3)
    x = jax.random.normal(jax.random.fold_in(k, 0), (2, 16, 40), jnp.float32)
    wt = 0.1 * jax.random.normal(jax.random.fold_in(k, 1), (16, 8, 4), jnp.float32)
    bt = 0.1 * jax.random.normal(jax.random.fold_in(k, 2), (8,), jnp.float32)
    up_p = prepare_conv_transpose(wt, bt, 2, 1, jnp.float32)
    y = apply_conv_transpose(x, up_p, pre_leaky=0.1, compute_dtype=jnp.float32)
    ref = np_conv_transpose1d(np_leaky(_np(x), 0.1), _np(wt), _np(bt), 2, 1)
    assert np.allclose(_np(jax.block_until_ready(y)), ref, rtol=2e-2, atol=1e-2)

    # ---- full generator (bf16 compute) vs float64 reference ----
    N_MELS, HID = 8, 32
    K_U = [4, 4]
    K_R = [3, 5]
    D_R = [[[1, 2], [3, 1]], [[1, 3], [5, 1]]]
    LEAKY = 0.1
    B, T = 2, 16

    kx, kp = jax.random.split(jax.random.fold_in(key, 4))
    mel = jax.random.normal(kx, (B, N_MELS, T), jnp.float32)
    raw = init_raw_params(kp, N_MELS, HID, K_U, K_R, D_R)
    params = prepare_params(raw, K_U, K_R, D_R, dtype=COMPUTE_DTYPE)

    gen = jax.jit(lambda inp: generator_fwd(inp, params, leaky=LEAKY))
    y = jax.block_until_ready(gen(mel))

    expected_len = T
    for ku in K_U:
        expected_len *= ku // 2
    assert y.shape == (B, expected_len), y.shape
    assert bool(jnp.all(jnp.isfinite(y)))
    assert bool(jnp.all(jnp.abs(y) <= 1.0))                    # tanh range
    y_ref = np_generator(mel, raw, K_U, K_R, D_R, LEAKY)
    assert np.max(np.abs(_np(y) - y_ref)) < 5e-2               # bf16 vs f64 tolerance

    print("KERNEL_OK")
</pallas_src>

<mosaic_0001>
module attributes {stable_mosaic.version = 11 : i64} {
  func.func @_conv1d_kernel(%arg0: i32, %arg1: i32, %arg2: memref<1x16x104xf32, #tpu.memory_space<vmem>>, %arg3: memref<16x80xf32, #tpu.memory_space<vmem>>, %arg4: memref<16x1xf32, #tpu.memory_space<vmem>>, %arg5: memref<1x16x96xf32, #tpu.memory_space<vmem>>) attributes {dimension_semantics = [#tpu.dimension_semantics<parallel>, #tpu.dimension_semantics<parallel>], iteration_bounds = array<i64: 1, 1>, scalar_prefetch = 0 : i64, scratch_operands = 0 : i64, tpu.core_type = #tpu.core_type<tc>, window_params = [{transform_indices = @transform_0, window_bounds = array<i64: 1, 16, 104>}, {pipeline_mode = #tpu.pipeline_mode<synchronous>, transform_indices = @transform_1, window_bounds = array<i64: 16, 80>}, {pipeline_mode = #tpu.pipeline_mode<synchronous>, transform_indices = @transform_2, window_bounds = array<i64: 16, 1>}, {transform_indices = @transform_3, window_bounds = array<i64: 1, 16, 96>}]} {
    %c0 = arith.constant 0 : index
    %c0_0 = arith.constant 0 : index
    %c0_1 = arith.constant 0 : index
    %0 = vector.load %arg2[%c0, %c0_0, %c0_1] : memref<1x16x104xf32, #tpu.memory_space<vmem>>, vector<1x16x104xf32>
    %1 = vector.shape_cast %0 : vector<1x16x104xf32> to vector<16x104xf32>
    %cst = arith.constant 0.000000e+00 : f32
    %2 = vector.broadcast %cst : f32 to vector<16x104xf32>
    %3 = arith.cmpf oge, %1, %2 : vector<16x104xf32>
    %cst_2 = arith.constant 1.000000e-01 : f32
    %4 = vector.broadcast %cst_2 : f32 to vector<16x104xf32>
    %5 = arith.mulf %4, %1 : vector<16x104xf32>
    %6 = arith.select %3, %1, %5 : vector<16x104xi1>, vector<16x104xf32>
    %c0_3 = arith.constant 0 : index
    %c0_4 = arith.constant 0 : index
    %7 = vector.load %arg3[%c0_3, %c0_4] : memref<16x80xf32, #tpu.memory_space<vmem>>, vector<16x80xf32>
    %8 = vector.extract_strided_slice %6 {offsets = [0, 0], sizes = [16, 96], strides = [1, 1]} : vector<16x104xf32> to vector<16x96xf32>
    %9 = vector.extract_strided_slice %6 {offsets = [0, 2], sizes = [16, 96], strides = [1, 1]} : vector<16x104xf32> to vector<16x96xf32>
    %10 = vector.extract_strided_slice %6 {offsets = [0, 4], sizes = [16, 96], strides = [1, 1]} : vector<16x104xf32> to vector<16x96xf32>
    %11 = vector.extract_strided_slice %6 {offsets = [0, 6], sizes = [16, 96], strides = [1, 1]} : vector<16x104xf32> to vector<16x96xf32>
    %12 = vector.extract_strided_slice %6 {offsets = [0, 8], sizes = [16, 96], strides = [1, 1]} : vector<16x104xf32> to vector<16x96xf32>
    %13 = tpu.concatenate %8, %9, %10, %11, %12 in 0 : vector<16x96xf32>, vector<16x96xf32>, vector<16x96xf32>, vector<16x96xf32>, vector<16x96xf32> -> vector<80x96xf32>
    %cst_5 = arith.constant dense<0.000000e+00> : vector<16x96xf32>
    %14 = tpu.matmul %7, %13, %cst_5 {dimension_numbers = #tpu.dot_dimension_numbers<[1], [0], [0], [1], [0, 0, 1, 1], [], []>} : vector<16x80xf32>, vector<80x96xf32>, vector<16x96xf32> -> vector<16x96xf32>
    %c0_6 = arith.constant 0 : index
    %c0_7 = arith.constant 0 : index
    %15 = vector.load %arg4[%c0_6, %c0_7] : memref<16x1xf32, #tpu.memory_space<vmem>>, vector<16x1xf32>
    %16 = vector.broadcast %15 : vector<16x1xf32> to vector<16x96xf32>
    %17 = arith.addf %14, %16 : vector<16x96xf32>
    %c0_8 = arith.constant 0 : index
    %c0_9 = arith.constant 0 : index
    %c0_10 = arith.constant 0 : index
    %18 = vector.load %arg5[%c0_8, %c0_9, %c0_10] : memref<1x16x96xf32, #tpu.memory_space<vmem>>, vector<1x16x96xf32>
    %19 = vector.shape_cast %18 : vector<1x16x96xf32> to vector<16x96xf32>
    %20 = vector.shape_cast %17 : vector<16x96xf32> to vector<1x16x96xf32>
    tpu.vector_store %arg5[%c0_8, %c0_9, %c0_10], %20 {strides = array<i32>} : memref<1x16x96xf32, #tpu.memory_space<vmem>>, vector<1x16x96xf32>,
    return
  }
  func.func @transform_0(%arg0: i32, %arg1: i32) -> (i32, i32, i32) {
    %c0_i32 = arith.constant 0 : i32
    %c0_i32_0 = arith.constant 0 : i32
    %c0_i32_1 = arith.constant 0 : i32
    return %arg0, %c0_i32, %c0_i32_0 : i32, i32, i32
  }
  func.func @transform_1(%arg0: i32, %arg1: i32) -> (i32, i32) {
    %c0_i32 = arith.constant 0 : i32
    %c0_i32_0 = arith.constant 0 : i32
    %c0_i32_1 = arith.constant 0 : i32
    return %c0_i32, %c0_i32_0 : i32, i32
  }
  func.func @transform_2(%arg0: i32, %arg1: i32) -> (i32, i32) {
    %c0_i32 = arith.constant 0 : i32
    %c0_i32_0 = arith.constant 0 : i32
    %c0_i32_1 = arith.constant 0 : i32
    return %c0_i32, %c0_i32_0 : i32, i32
  }
  func.func @transform_3(%arg0: i32, %arg1: i32) -> (i32, i32, i32) {
    %c0_i32 = arith.constant 0 : i32
    %c0_i32_0 = arith.constant 0 : i32
    return %arg0, %c0_i32, %arg1 : i32, i32, i32
  }
}

</mosaic_0001>

<llo_original>
// kernel: tpu_custom_call.1
$region0: #{tpu_custom_call.1}
  #allocation0 [shape = 'u32[]', space=smem, size = 0x4, offset = 0x4, fixed_abs, tag = 'smem constant byte address 0x4 - core index']
  #allocation1 [shape = 'u32[144,128]{1,0:T(1,128)}', space=vmem, size = 0x12000, scoped, tag = 'internal scratch']
  %s0 = inlined_call_operand.vmem [shape: f32[1,16,104], index: 0, kind: input, shape index: {}]
  %s1 = inlined_call_operand.hbm [shape: f32[16,80], index: 1, kind: input, shape index: {}]
  %s2 = inlined_call_operand.vmem [shape: f32[16,1], index: 2, kind: input, shape index: {}]
  %s3 = inlined_call_operand.hbm [shape: f32[1,16,96], index: 3, kind: output, shape index: {}]
  %s4 = sld [smem:[#allocation0]]
  $region26: #{tpu_custom_call.1} parent=0
    _
  %s6 = ssub.s32 1, %s4
  %s7 = scalar_select 0, %s6, %s4
  $region1: #{tpu_custom_call.1} parent=0
    #allocation2 [shape = 'u8[8192]{0}', space=vmem, size = 0x2000, scoped, tag = 'input window, operand 1, single buffered']
    #allocation3 [shape = 's32[1]{0}', space=sflag, size = 0x4, scoped, tag = 'scoped memory for tpu_custom_call.1']
    #allocation4 [shape = 's32[1]{0}', space=sflag, size = 0x4, scoped, tag = 'scoped memory for tpu_custom_call.1']
    #allocation5 [shape = 'u8[8192]{0}', space=vmem, size = 0x2000, scoped, tag = 'output window, operand 0, single buffered']
    %8 = vsyncpa [#allocation3], 0
    %9 = vsyncpa [#allocation4], 0
    // Predicated region
    $region2: #{tpu_custom_call.1} parent=1 // pred_check
      _
    $region3: #{tpu_custom_call.1} parent=1 // pred_check_branch
      %11 = sbr.rel (0) target = $region5
    $region4: #{tpu_custom_call.1} parent=1 // pred_region
      _
    $region5: #{tpu_custom_call.1} parent=1 // pred_fallthru
      _
    // Predicated region
    $region6: #{tpu_custom_call.1} parent=1 // pred_check
      _
    $region7: #{tpu_custom_call.1} parent=1 // pred_check_branch
      %13 = sbr.rel (0) target = $region9
    $region8: #{tpu_custom_call.1} parent=1 // pred_region
      %s15 = ssub.s32 256, 256
      %16 = vsyncadd [#allocation3], %s15
      %s17 = sshll.u32 [#allocation2], 4
      %s18 = int_to_ptr.vmem [resolvable:$true] %s17
      %23 = dma.hbm_to_vmem [thread:$0]  %s1, 256, %s18, [#allocation3], 128, 128, 8
    $region9: #{tpu_custom_call.1} parent=1 // pred_fallthru
      _
    // Predicated region
    $region10: #{tpu_custom_call.1} parent=1 // pred_check
      _
    $region11: #{tpu_custom_call.1} parent=1 // pred_check_branch
      %25 = sbr.rel (0) target = $region13
    $region12: #{tpu_custom_call.1} parent=1 // pred_region
      _
    $region13: #{tpu_custom_call.1} parent=1 // pred_fallthru
      _
    // Predicated region
    $region14: #{tpu_custom_call.1} parent=1 // pred_check
      _
    $region15: #{tpu_custom_call.1} parent=1 // pred_check_branch
      %27 = sbr.rel (0) target = $region17
    $region16: #{tpu_custom_call.1} parent=1 // pred_region
      %28 = dma.done [#allocation3], 256
    $region17: #{tpu_custom_call.1} parent=1 // pred_fallthru
      _
    %v29 = vld [vmem:[%s0] sm:$0xff]
    %v30 = vld [vmem:[%s0 + $0x8] sm:$0xff]
    %vm31 = vcmp.ge.f32.partialorder %v29, 0.0
    %vm32 = vcmp.ge.f32.partialorder %v30, 0.0
    %v33 = vmul.f32 %v29, 0.1
    %v34 = vmul.f32 %v30, 0.1
    %v35 = vsel %vm31, %v29, %v33
    %v36 = vsel %vm32, %v30, %v34
    %v37 = vld [vmem:[#allocation2] sm:$0xff]
    %v38 = vld [vmem:[#allocation2 + $0x8] sm:$0xff]
    %41 = vrot.lane.b32.xlu0 %v35, 126
    %v42 = vpop.permute.xlu0 %41
    %43 = vrot.lane.b32.xlu0 %v36, 126
    %v44 = vpop.permute.xlu0 %43
    %47 = vrot.lane.b32.xlu0 %v35, 124
    %v48 = vpop.permute.xlu0 %47
    %49 = vrot.lane.b32.xlu0 %v36, 124
    %v50 = vpop.permute.xlu0 %49
    %53 = vrot.lane.b32.xlu0 %v35, 122
    %v54 = vpop.permute.xlu0 %53
    %55 = vrot.lane.b32.xlu0 %v36, 122
    %v56 = vpop.permute.xlu0 %55
    %59 = vrot.lane.b32.xlu0 %v35, 120
    %v60 = vpop.permute.xlu0 %59
    %61 = vrot.lane.b32.xlu0 %v36, 120
    %v62 = vpop.permute.xlu0 %61
    %v65 = vld [vmem:[%s2] sm:$0xff]
    %v66 = vld [vmem:[%s2 + $0x8] sm:$0xff]
    %68 = vset.pattern.permute.xlu0 0
    %69 = vperm.xlu0 %68, %v65
    %v70 = vpop.permute.xlu0 %69
    %73 = vset.pattern.permute.xlu0 0
    %74 = vperm.xlu0 %73, %v66
    %v75 = vpop.permute.xlu0 %74
    %vm77 = vcmask 654336
    %v79 = vsel %vm77, %v37, 0
    %v82 = vsel %vm77, %v38, 0
    %84 = vmatprep.subr.mxu0 0.0
    %85 = vmatpush1.msra.mxu0 %v35
    %86 = vmatprep.subr.mxu0 0.0
    %87 = vmatpush1.msra.mxu0 %v36
    %88 = vmatprep.subr.mxu0 0.0
    %89 = vmatpush1.msra.mxu0 %v42
    %90 = vmatprep.subr.mxu0 0.0
    %91 = vmatpush1.msra.mxu0 %v44
    %92 = vmatprep.subr.mxu0 0.0
    %93 = vmatpush1.msra.mxu0 %v48
    %94 = vmatprep.subr.mxu0 0.0
    %95 = vmatpush1.msra.mxu0 %v50
    %96 = vmatprep.subr.mxu0 0.0
    %97 = vmatpush1.msra.mxu0 %v54
    %98 = vmatprep.subr.mxu0 0.0
    %99 = vmatpush1.msra.mxu0 %v56
    %100 = vmatprep.subr.mxu0 0.0
    %101 = vmatpush1.msra.mxu0 %v60
    %102 = vmatprep.subr.mxu0 0.0
    %103 = vmatpush1.msra.mxu0 %v62
    %104 = vmatprep.subr.mxu0 0.0
    %105 = vmatpush1.msra.mxu0 0.0
    %106 = vmatprep.subr.mxu0 0.0
    %107 = vmatpush1.msra.mxu0 0.0
    %108 = vmatprep.subr.mxu0 0.0
    %109 = vmatpush1.msra.mxu0 0.0
    %110 = vmatprep.subr.mxu0 0.0
    %111 = vmatpush1.msra.mxu0 0.0
    %112 = vmatprep.subr.mxu0 0.0
    %113 = vmatpush1.msra.mxu0 0.0
    %114 = vmatprep.subr.mxu0 0.0
    %115 = vmatpush1.msra.mxu0 0.0
    %116 = vmatprep.subr.mxu0 0.0
    %117 = vmatpush1.msra.mxu0 0.0
    %118 = vmatprep.subr.mxu0 0.0
    %119 = vmatpush1.msra.mxu0 0.0
    %120 = vmatprep.subr.mxu0 0.0
    %121 = vmatpush1.msra.mxu0 0.0
    %122 = vmatprep.subr.mxu0 0.0
    %123 = vmatpush1.msra.mxu0 0.0
    %124 = vmatprep.subr.mxu0 0.0
    %125 = vmatpush1.msra.mxu0 0.0
    %126 = vmatprep.subr.mxu0 0.0
    %127 = vmatpush1.msra.mxu0 0.0
    %128 = vmatprep.subr.mxu0 0.0
    %129 = vmatpush1.msra.mxu0 0.0
    %130 = vmatprep.subr.mxu0 0.0
    %131 = vmatpush1.msra.mxu0 0.0
    %132 = vmatprep.subr.mxu0 0.0
    %133 = vmatpush1.msra.mxu0 0.0
    %134 = vmatprep.subr.mxu0 0.0
    %135 = vmatpush1.msra.mxu0 0.0
    %136 = vmatprep.subr.mxu0 0.0
    %137 = vmatpush1.msra.mxu0 0.0
    %138 = vmatprep.subr.mxu0 0.0
    %139 = vmatpush1.msra.mxu0 0.0
    %140 = vmatprep.subr.mxu0 0.0
    %141 = vmatpush1.msra.mxu0 0.0
    %142 = vmatprep.subr.mxu0 0.0
    %143 = vmatpush1.msra.mxu0 0.0
    %144 = vmatprep.subr.mxu0 0.0
    %145 = vmatpush1.msra.mxu0 0.0
    %146 = vmatprep.subr.mxu0 0.0
    %147 = vmatpush1.msra.mxu0 0.0
    %148 = vmatprep.mubr.f32.mxu0 0.0
    %149 = vmatmul.mubr.f32.gmra.mrb[0].mxu0 %v79
    %v150 = vpop.f32.mrb[0].mxu0
    %v151 = vadd.f32 %v70, %v150
    %v152 = vpop.f32.mrb[0].mxu0
    %153 = vmatprep.mubr.f32.mxu0 0.0
    %154 = vmatmul.mubr.f32.gmra.mrb[0].mxu0 %v82
    %v155 = vpop.f32.mrb[0].mxu0
    %v156 = vadd.f32 %v75, %v155
    %v157 = vpop.f32.mrb[0].mxu0
    %158 = vdwg.mxu0
    %vm159 = vcmask 785408
    %160 = vst.msk [vmem:[#allocation5] sm:$0xff] %vm159, %v151
    %161 = vst.msk [vmem:[#allocation5 + $0x8] sm:$0xff] %vm159, %v156
    // Predicated region
    $region18: #{tpu_custom_call.1} parent=1 // pred_check
      _
    $region19: #{tpu_custom_call.1} parent=1 // pred_check_branch
      %163 = sbr.rel (0) target = $region21
    $region20: #{tpu_custom_call.1} parent=1 // pred_region
      %s165 = ssub.s32 256, 256
      %166 = vsyncadd [#allocation4], %s165
      %s167 = sshll.u32 [#allocation5], 4
      %s168 = int_to_ptr.vmem [resolvable:$true] %s167
      %173 = dma.vmem_to_hbm [thread:$0]  %s168, 256, %s3, [#allocation4], 128, 128, 8
    $region21: #{tpu_custom_call.1} parent=1 // pred_fallthru
      _
    // Predicated region
    $region22: #{tpu_custom_call.1} parent=1 // pred_check
      _
    $region23: #{tpu_custom_call.1} parent=1 // pred_check_branch
      %175 = sbr.rel (0) target = $region25
    $region24: #{tpu_custom_call.1} parent=1 // pred_region
      %176 = dma.done [#allocation4], 256
    $region25: #{tpu_custom_call.1} parent=1 // pred_fallthru
      _
    %177 = vsyncpa [#allocation3], 1
    %178 = vsyncpa [#allocation4], 1

</llo_original>
